<compile_context>
chip_gen: v5e
topology: v5e:2x2
jax: 0.10.0
libtpu: 0.0.40
codegen_flags: <defaults>
</compile_context>

<pallas_src>
import math

import numpy as np
import jax
import jax.numpy as jnp
from jax.experimental import pallas as pl
from jax.experimental.pallas import tpu as pltpu


# ---------------------------------------------------------------------------
# Fused per-group kernel: global-avg-pool -> backbone linear -> head linear
# ---------------------------------------------------------------------------

def _fused_group_kernel(x_ref, sel_ref, bbw_rep_ref, bb_b_ref,
                        head_w_ref, head_b_ref, out_ref):
    # x_ref:       (bm*C, S)   channel axis collapsed into rows (dense sublanes)
    # sel_ref:     (bm, bm*C)  0/1 selector: sums groups of C consecutive rows
    # bbw_rep_ref: (bm*C, D)   bb_w tiled bm times along rows, pre-scaled by 1/S
    # bb_b_ref:    (1, D)
    # head_w_ref:  (D, Kp)     head weight, K padded to a lane multiple
    # head_b_ref:  (1, Kp)
    # out_ref:     (1, bm, Kp) lane-dense output block
    x = x_ref[...].astype(jnp.float32)
    pooled = jnp.sum(x, axis=-1, keepdims=True)                 # (bm*C, 1)  spatial sum
    contrib = pooled * bbw_rep_ref[...]                         # (bm*C, D)  (= mean * bb_w)
    feats = jnp.dot(sel_ref[...], contrib,
                    preferred_element_type=jnp.float32) + bb_b_ref[...]   # (bm, D)
    out = jnp.dot(feats, head_w_ref[...],
                  preferred_element_type=jnp.float32) + head_b_ref[...]   # (bm, Kp)
    out_ref[0] = out.astype(out_ref.dtype)


# ---------------------------------------------------------------------------
# MultiCropWrapper.forward equivalent
# ---------------------------------------------------------------------------

def multi_crop_forward(x, params, ncrops=1, block_m=128):
    """Mirrors MultiCropWrapper.forward for the synthetic backbone/head.

    x: single array (N, C, H, W) or a list of such arrays (crops, possibly with
       different last-dim resolutions).  `block_m` is the number of crop-batch
       rows processed per grid step (use >=128 at real sizes; ~half on v7x).
    """
    if not isinstance(x, (list, tuple)):
        x = [x]

    # torch.cumsum(torch.unique_consecutive([w_i], return_counts=True)[1], 0):
    # consecutive same-width crops form one backbone forward.
    widths = [int(xi.shape[-1]) for xi in x]
    groups, start = [], 0
    for i in range(1, len(x) + 1):
        if i == len(x) or widths[i] != widths[start]:
            groups.append((start, i))
            start = i

    bb_w, bb_b = params["bb_w"], params["bb_b"]
    head_w, head_b = params["head_w"], params["head_b"]
    D = bb_w.shape[1]
    K = head_w.shape[1]
    Kp = K if K % 128 == 0 else ((K + 127) // 128) * 128        # lane-dense stores
    if Kp != K:
        head_w = jnp.pad(head_w, ((0, 0), (0, Kp - K)))
        head_b = jnp.pad(head_b, ((0, 0), (0, Kp - K)))

    outs = []
    for (s0, s1) in groups:
        # == torch.cat(x[start_idx:end_idx]) inside the group (same resolution,
        # so no zero padding is ever introduced).
        xg = jnp.concatenate([xi for xi in x[s0:s1]], axis=0)   # (Mg, C, H, W)
        Mg, Cg, H, W = xg.shape
        S = H * W
        x2d = xg.reshape(Mg * Cg, S)                            # free reshape, lanes = spatial

        # Row-block sizing: bm crop-batch rows per grid step; bm*C must be a
        # sublane multiple (or the full extent) for a dense x block.
        sub = max(1, 8 // math.gcd(8, Cg))
        bm = max(1, min(block_m, Mg))
        bm = ((bm + sub - 1) // sub) * sub
        nblk = pl.cdiv(Mg, bm)
        Mp = nblk * bm
        if Mp != Mg:                                            # tiny tail pad (< bm rows)
            x2d = jnp.pad(x2d, ((0, (Mp - Mg) * Cg), (0, 0)))
        Rb = bm * Cg

        # Selector folding the (bm*C, 1) pooled column back into (bm, C) via MXU,
        # and bb_w replicated per block row with the 1/S pooling scale folded in.
        sel = (jnp.arange(Rb)[None, :] // Cg
               == jnp.arange(bm)[:, None]).astype(jnp.float32)          # (bm, Rb)
        bbw_rep = (jnp.tile(bb_w, (bm, 1)) * (1.0 / S)).astype(jnp.float32)  # (Rb, D)

        out3 = pl.pallas_call(
            _fused_group_kernel,
            out_shape=jax.ShapeDtypeStruct((nblk, bm, Kp), jnp.float32),
            grid=(nblk,),
            in_specs=[
                pl.BlockSpec((Rb, S), lambda i: (i, 0)),        # x rows: pipelined
                pl.BlockSpec((bm, Rb), lambda i: (0, 0)),       # weights: VMEM-resident
                pl.BlockSpec((Rb, D), lambda i: (0, 0)),
                pl.BlockSpec((1, D), lambda i: (0, 0)),
                pl.BlockSpec((D, Kp), lambda i: (0, 0)),
                pl.BlockSpec((1, Kp), lambda i: (0, 0)),
            ],
            out_specs=pl.BlockSpec((1, bm, Kp), lambda i: (i, 0, 0)),
            compiler_params=pltpu.CompilerParams(
                dimension_semantics=("parallel",),
                vmem_limit_bytes=32 * 1024 * 1024,              # raise at real sizes
            ),
        )(x2d, sel, bbw_rep, bb_b, head_w, head_b)

        outs.append(out3.reshape(Mp, Kp)[:Mg])

    # Concatenate per-group outputs (row order == torch concatenation order).
    out = jnp.concatenate(outs, axis=0)
    if Kp != K:
        out = out[:, :K]
    return out


# ---------------------------------------------------------------------------
# Main
# ---------------------------------------------------------------------------

if __name__ == "__main__":
    key = jax.random.PRNGKey(0)
    k_bbw, k_bbb, k_hw, k_hb, k_x1, k_x2, k_x3, k_x4 = jax.random.split(key, 8)

    # Module-implied small sizes: per-crop batch=2, channels=4, H=16,
    # two resolutions W=16 (global crops) and W=8 (local crops),
    # hidden D=32, head output K=16.
    N, C, H = 2, 4, 16
    D, K = 32, 16

    params = {
        "bb_w": jax.random.normal(k_bbw, (C, D), jnp.float32) * 0.1,
        "bb_b": jax.random.normal(k_bbb, (1, D), jnp.float32) * 0.1,
        "head_w": jax.random.normal(k_hw, (D, K), jnp.float32) * 0.1,
        "head_b": jax.random.normal(k_hb, (1, K), jnp.float32) * 0.1,
    }

    # 2 global crops (W=16) followed by 2 local crops (W=8)
    x = [
        jax.random.normal(k_x1, (N, C, H, 16), jnp.float32),
        jax.random.normal(k_x2, (N, C, H, 16), jnp.float32),
        jax.random.normal(k_x3, (N, C, H, 8), jnp.float32),
        jax.random.normal(k_x4, (N, C, H, 8), jnp.float32),
    ]

    # block_m=2 exercises a real multi-step pipelined grid at these toy sizes;
    # use the default 128 (and bf16 crops) at realistic DINO shapes.
    out = multi_crop_forward(x, params, ncrops=len(x), block_m=2)
    jax.block_until_ready(out)

    # Pure-JAX reference of the original per-resolution-group semantics.
    def ref(x_list):
        feats = []
        for start, end in ((0, 2), (2, 4)):
            xc = jnp.concatenate(x_list[start:end], axis=0)
            pooled = jnp.mean(xc, axis=(2, 3))
            feats.append(pooled @ params["bb_w"] + params["bb_b"])
        f = jnp.concatenate(feats, axis=0)
        return f @ params["head_w"] + params["head_b"]

    ref_out = ref(x)
    assert out.shape == (len(x) * N, K), out.shape
    np.testing.assert_allclose(np.asarray(out), np.asarray(ref_out),
                               rtol=1e-5, atol=1e-5)
    print("KERNEL_OK")
</pallas_src>

<mosaic_0001>
module attributes {stable_mosaic.version = 11 : i64} {
  func.func @_fused_group_kernel(%arg0: i32, %arg1: memref<8x256xf32, #tpu.memory_space<vmem>>, %arg2: memref<2x8xf32, #tpu.memory_space<vmem>>, %arg3: memref<8x32xf32, #tpu.memory_space<vmem>>, %arg4: memref<1x32xf32, #tpu.memory_space<vmem>>, %arg5: memref<32x128xf32, #tpu.memory_space<vmem>>, %arg6: memref<1x128xf32, #tpu.memory_space<vmem>>, %arg7: memref<1x2x128xf32, #tpu.memory_space<vmem>>) attributes {dimension_semantics = [#tpu.dimension_semantics<parallel>], iteration_bounds = array<i64: 2>, scalar_prefetch = 0 : i64, scratch_operands = 0 : i64, tpu.core_type = #tpu.core_type<tc>, window_params = [{transform_indices = @transform_0, window_bounds = array<i64: 8, 256>}, {pipeline_mode = #tpu.pipeline_mode<synchronous>, transform_indices = @transform_1, window_bounds = array<i64: 2, 8>}, {pipeline_mode = #tpu.pipeline_mode<synchronous>, transform_indices = @transform_2, window_bounds = array<i64: 8, 32>}, {pipeline_mode = #tpu.pipeline_mode<synchronous>, transform_indices = @transform_3, window_bounds = array<i64: 1, 32>}, {pipeline_mode = #tpu.pipeline_mode<synchronous>, transform_indices = @transform_4, window_bounds = array<i64: 32, 128>}, {pipeline_mode = #tpu.pipeline_mode<synchronous>, transform_indices = @transform_5, window_bounds = array<i64: 1, 128>}, {transform_indices = @transform_6, window_bounds = array<i64: 1, 2, 128>}]} {
    %c0 = arith.constant 0 : index
    %c0_0 = arith.constant 0 : index
    %0 = vector.load %arg1[%c0, %c0_0] : memref<8x256xf32, #tpu.memory_space<vmem>>, vector<8x256xf32>
    %cst = arith.constant dense<0.000000e+00> : vector<8xf32>
    %1 = vector.multi_reduction <add>, %0, %cst [1] : vector<8x256xf32> to vector<8xf32>
    %2 = vector.shape_cast %1 : vector<8xf32> to vector<8x1xf32>
    %c0_1 = arith.constant 0 : index
    %c0_2 = arith.constant 0 : index
    %3 = vector.load %arg3[%c0_1, %c0_2] : memref<8x32xf32, #tpu.memory_space<vmem>>, vector<8x32xf32>
    %4 = vector.broadcast %2 : vector<8x1xf32> to vector<8x32xf32>
    %5 = arith.mulf %4, %3 : vector<8x32xf32>
    %c0_3 = arith.constant 0 : index
    %c0_4 = arith.constant 0 : index
    %6 = vector.load %arg2[%c0_3, %c0_4] : memref<2x8xf32, #tpu.memory_space<vmem>>, vector<2x8xf32>
    %cst_5 = arith.constant dense<0.000000e+00> : vector<2x32xf32>
    %7 = tpu.matmul %6, %5, %cst_5 {dimension_numbers = #tpu.dot_dimension_numbers<[1], [0], [0], [1], [0, 0, 1, 1], [], []>} : vector<2x8xf32>, vector<8x32xf32>, vector<2x32xf32> -> vector<2x32xf32>
    %c0_6 = arith.constant 0 : index
    %c0_7 = arith.constant 0 : index
    %8 = vector.load %arg4[%c0_6, %c0_7] : memref<1x32xf32, #tpu.memory_space<vmem>>, vector<1x32xf32>
    %9 = vector.broadcast %8 : vector<1x32xf32> to vector<2x32xf32>
    %10 = arith.addf %7, %9 : vector<2x32xf32>
    %c0_8 = arith.constant 0 : index
    %c0_9 = arith.constant 0 : index
    %11 = vector.load %arg5[%c0_8, %c0_9] : memref<32x128xf32, #tpu.memory_space<vmem>>, vector<32x128xf32>
    %cst_10 = arith.constant dense<0.000000e+00> : vector<2x128xf32>
    %12 = tpu.matmul %10, %11, %cst_10 {dimension_numbers = #tpu.dot_dimension_numbers<[1], [0], [0], [1], [0, 0, 1, 1], [], []>} : vector<2x32xf32>, vector<32x128xf32>, vector<2x128xf32> -> vector<2x128xf32>
    %c0_11 = arith.constant 0 : index
    %c0_12 = arith.constant 0 : index
    %13 = vector.load %arg6[%c0_11, %c0_12] : memref<1x128xf32, #tpu.memory_space<vmem>>, vector<1x128xf32>
    %14 = vector.broadcast %13 : vector<1x128xf32> to vector<2x128xf32>
    %15 = arith.addf %12, %14 : vector<2x128xf32>
    %c0_13 = arith.constant 0 : index
    %c0_14 = arith.constant 0 : index
    %c0_15 = arith.constant 0 : index
    %16 = vector.load %arg7[%c0_13, %c0_14, %c0_15] : memref<1x2x128xf32, #tpu.memory_space<vmem>>, vector<1x2x128xf32>
    %17 = vector.shape_cast %16 : vector<1x2x128xf32> to vector<2x128xf32>
    %18 = vector.shape_cast %15 : vector<2x128xf32> to vector<1x2x128xf32>
    tpu.vector_store %arg7[%c0_13, %c0_14, %c0_15], %18 {strides = array<i32>} : memref<1x2x128xf32, #tpu.memory_space<vmem>>, vector<1x2x128xf32>,
    return
  }
  func.func @transform_0(%arg0: i32) -> (i32, i32) {
    %c0_i32 = arith.constant 0 : i32
    %c0_i32_0 = arith.constant 0 : i32
    return %arg0, %c0_i32 : i32, i32
  }
  func.func @transform_1(%arg0: i32) -> (i32, i32) {
    %c0_i32 = arith.constant 0 : i32
    %c0_i32_0 = arith.constant 0 : i32
    %c0_i32_1 = arith.constant 0 : i32
    return %c0_i32, %c0_i32_0 : i32, i32
  }
  func.func @transform_2(%arg0: i32) -> (i32, i32) {
    %c0_i32 = arith.constant 0 : i32
    %c0_i32_0 = arith.constant 0 : i32
    %c0_i32_1 = arith.constant 0 : i32
    return %c0_i32, %c0_i32_0 : i32, i32
  }
  func.func @transform_3(%arg0: i32) -> (i32, i32) {
    %c0_i32 = arith.constant 0 : i32
    %c0_i32_0 = arith.constant 0 : i32
    %c0_i32_1 = arith.constant 0 : i32
    return %c0_i32, %c0_i32_0 : i32, i32
  }
  func.func @transform_4(%arg0: i32) -> (i32, i32) {
    %c0_i32 = arith.constant 0 : i32
    %c0_i32_0 = arith.constant 0 : i32
    %c0_i32_1 = arith.constant 0 : i32
    return %c0_i32, %c0_i32_0 : i32, i32
  }
  func.func @transform_5(%arg0: i32) -> (i32, i32) {
    %c0_i32 = arith.constant 0 : i32
    %c0_i32_0 = arith.constant 0 : i32
    %c0_i32_1 = arith.constant 0 : i32
    return %c0_i32, %c0_i32_0 : i32, i32
  }
  func.func @transform_6(%arg0: i32) -> (i32, i32, i32) {
    %c0_i32 = arith.constant 0 : i32
    %c0_i32_0 = arith.constant 0 : i32
    %c0_i32_1 = arith.constant 0 : i32
    return %arg0, %c0_i32, %c0_i32_0 : i32, i32, i32
  }
}

</mosaic_0001>

<llo_original>
// kernel: tpu_custom_call.1
$region0: #{tpu_custom_call.1}
  #allocation0 [shape = 'u32[]', space=smem, size = 0x4, offset = 0x4, fixed_abs, tag = 'smem constant byte address 0x4 - core index']
  #allocation1 [shape = 'u32[72,128]{1,0:T(1,128)}', space=vmem, size = 0x9000, scoped, tag = 'internal scratch']
  %s0 = inlined_call_operand.hbm [shape: f32[16,256], index: 0, kind: input, shape index: {}]
  %s1 = inlined_call_operand.hbm [shape: f32[2,8], index: 1, kind: input, shape index: {}]
  %s2 = inlined_call_operand.hbm [shape: f32[8,32], index: 2, kind: input, shape index: {}]
  %s3 = inlined_call_operand.vmem [shape: f32[1,32], index: 3, kind: input, shape index: {}]
  %s4 = inlined_call_operand.hbm [shape: f32[32,128], index: 4, kind: input, shape index: {}]
  %s5 = inlined_call_operand.vmem [shape: f32[1,128], index: 5, kind: input, shape index: {}]
  %s6 = inlined_call_operand.hbm [shape: f32[2,2,128], index: 6, kind: output, shape index: {}]
  %s7 = sld [smem:[#allocation0]]
  $region73: #{tpu_custom_call.1} parent=0
    _
  %s9 = ssub.s32 1, %s7
  %s10 = scalar_select 0, %s9, %s7
  $region1: #{tpu_custom_call.1} parent=0
    #allocation2 [shape = 'u8[16384]{0}', space=vmem, size = 0x4000, scoped, tag = 'input window, operand 0']
    #allocation3 [shape = 's32[2]{0}', space=sflag, size = 0x8, scoped, tag = 'scoped memory for tpu_custom_call.1']
    #allocation4 [shape = 's32[2]{0}', space=sflag, size = 0x8, scoped, tag = 'scoped memory for tpu_custom_call.1']
    #allocation5 [shape = 'u8[1024]{0}', space=vmem, size = 0x400, scoped, tag = 'input window, operand 1, single buffered']
    #allocation6 [shape = 's32[1]{0}', space=sflag, size = 0x4, scoped, tag = 'scoped memory for tpu_custom_call.1']
    #allocation7 [shape = 'u8[4096]{0}', space=vmem, size = 0x1000, scoped, tag = 'input window, operand 2, single buffered']
    #allocation8 [shape = 'u8[16384]{0}', space=vmem, size = 0x4000, scoped, tag = 'input window, operand 4, single buffered']
    #allocation9 [shape = 's32[1]{0}', space=sflag, size = 0x4, scoped, tag = 'scoped memory for tpu_custom_call.1']
    #allocation10 [shape = 'u8[2048]{0}', space=vmem, size = 0x800, scoped, tag = 'output window, operand 0']
    %11 = vsyncpa [#allocation3], 0
    %s12 = scalar_lea.sflag [#allocation3], 1
    %13 = vsyncpa %s12, 0
    %14 = vsyncpa [#allocation6], 0
    %15 = vsyncpa [#allocation9], 0
    %16 = vsyncpa [#allocation4], 0
    %s17 = scalar_lea.sflag [#allocation4], 1
    %18 = vsyncpa %s17, 0
    loop: start=0, step=1, limit=4
    $region2: #{tpu_custom_call.1} parent=1 // loop_pre_header
      _
    $region3: #{tpu_custom_call.1} parent=1 // loop_header
      %s20 = sphi 0, %s24
      %p21 = scmp.ge.s32.totalorder %s20, 4
      %s30 = sphi 0, %s32
      %s33 = sphi 0, %s30
      %s34 = sphi 0, %s33
      %s50 = sphi 0, %s34
      %s54 = sphi 0, %s54
      %s56 = sphi 0, %s54
      %s57 = sphi 0, %s56
      %s71 = sphi 0, %s57
      %s75 = sphi 0, %s75
      %s77 = sphi 0, %s75
      %s78 = sphi 0, %s77
      %s92 = sphi 0, %s78
      %s96 = sphi 0, %s96
      %s98 = sphi 0, %s96
      %s99 = sphi 0, %s98
      %s113 = sphi 0, %s99
      %s117 = sphi 0, %s117
      %s119 = sphi 0, %s117
      %s120 = sphi 0, %s119
      %s134 = sphi 0, %s120
      %s138 = sphi 0, %s138
      %s140 = sphi 0, %s138
      %s141 = sphi 0, %s140
      %s155 = sphi 0, %s141
      %s161 = sphi 0, %s163
      %s164 = sphi 0, %s161
      %s165 = sphi 0, %s164
      %s181 = sphi 0, %s165
    $region4: #{tpu_custom_call.1} parent=1 // loop_header_branch
      %23 = sbr.rel (%p21) target = $region8
    $region5: #{tpu_custom_call.1} parent=1 // loop_body
      %s25 = ssub.s32 %s20, 1
      %s26 = ssub.s32 %s20, 2
      %s27 = sadd.s32 %s20, 1
      %s28 = ssub.s32 %s20, %s27
      %p29 = scmp.eq.s32.totalorder %s28, 0
      %s31 = sadd.s32 %s30, 1
      %s32 = scalar_select %p29, %s30, %s31
      %p35 = pneg %p29
      %p36 = scmp.eq.s32.totalorder %s20, 1
      %p37 = por %p35, %p36
      %p38 = scmp.ne.s32.totalorder %s30, %s33
      %p39 = scmp.eq.s32.totalorder %s20, 0
      %p40 = por %p38, %p39
      %p41 = scmp.ne.s32.totalorder %s30, %s33
      %p42 = scmp.eq.s32.totalorder %s25, 1
      %p43 = por %p41, %p42
      %p44 = scmp.ne.s32.totalorder %s33, %s34
      %p45 = scmp.eq.s32.totalorder %s25, 0
      %p46 = por %p44, %p45
      %p47 = scmp.ne.s32.totalorder %s33, %s34
      %p48 = scmp.eq.s32.totalorder %s26, 1
      %p49 = por %p47, %p48
      %p51 = scmp.ne.s32.totalorder %s34, %s50
      %p52 = scmp.eq.s32.totalorder %s26, 0
      %p53 = por %p51, %p52
      %s55 = sadd.s32 %s54, 1
      %p58 = scmp.eq.s32.totalorder %s20, 1
      %p59 = scmp.ne.s32.totalorder %s54, %s56
      %p60 = scmp.eq.s32.totalorder %s20, 0
      %p61 = por %p59, %p60
      %p62 = scmp.ne.s32.totalorder %s54, %s56
      %p63 = scmp.eq.s32.totalorder %s25, 1
      %p64 = por %p62, %p63
      %p65 = scmp.ne.s32.totalorder %s56, %s57
      %p66 = scmp.eq.s32.totalorder %s25, 0
      %p67 = por %p65, %p66
      %p68 = scmp.ne.s32.totalorder %s56, %s57
      %p69 = scmp.eq.s32.totalorder %s26, 1
      %p70 = por %p68, %p69
      %p72 = scmp.ne.s32.totalorder %s57, %s71
      %p73 = scmp.eq.s32.totalorder %s26, 0
      %p74 = por %p72, %p73
      %s76 = sadd.s32 %s75, 1
      %p79 = scmp.eq.s32.totalorder %s20, 1
      %p80 = scmp.ne.s32.totalorder %s75, %s77
      %p81 = scmp.eq.s32.totalorder %s20, 0
      %p82 = por %p80, %p81
      %p83 = scmp.ne.s32.totalorder %s75, %s77
      %p84 = scmp.eq.s32.totalorder %s25, 1
      %p85 = por %p83, %p84
      %p86 = scmp.ne.s32.totalorder %s77, %s78
      %p87 = scmp.eq.s32.totalorder %s25, 0
      %p88 = por %p86, %p87
      %p89 = scmp.ne.s32.totalorder %s77, %s78
      %p90 = scmp.eq.s32.totalorder %s26, 1
      %p91 = por %p89, %p90
      %p93 = scmp.ne.s32.totalorder %s78, %s92
      %p94 = scmp.eq.s32.totalorder %s26, 0
      %p95 = por %p93, %p94
      %s97 = sadd.s32 %s96, 1
      %p100 = scmp.eq.s32.totalorder %s20, 1
      %p101 = scmp.ne.s32.totalorder %s96, %s98
      %p102 = scmp.eq.s32.totalorder %s20, 0
      %p103 = por %p101, %p102
      %p104 = scmp.ne.s32.totalorder %s96, %s98
      %p105 = scmp.eq.s32.totalorder %s25, 1
      %p106 = por %p104, %p105
      %p107 = scmp.ne.s32.totalorder %s98, %s99
      %p108 = scmp.eq.s32.totalorder %s25, 0
      %p109 = por %p107, %p108
      %p110 = scmp.ne.s32.totalorder %s98, %s99
      %p111 = scmp.eq.s32.totalorder %s26, 1
      %p112 = por %p110, %p111
      %p114 = scmp.ne.s32.totalorder %s99, %s113
      %p115 = scmp.eq.s32.totalorder %s26, 0
      %p116 = por %p114, %p115
      %s118 = sadd.s32 %s117, 1
      %p121 = scmp.eq.s32.totalorder %s20, 1
      %p122 = scmp.ne.s32.totalorder %s117, %s119
      %p123 = scmp.eq.s32.totalorder %s20, 0
      %p124 = por %p122, %p123
      %p125 = scmp.ne.s32.totalorder %s117, %s119
      %p126 = scmp.eq.s32.totalorder %s25, 1
      %p127 = por %p125, %p126
      %p128 = scmp.ne.s32.totalorder %s119, %s120
      %p129 = scmp.eq.s32.totalorder %s25, 0
      %p130 = por %p128, %p129
      %p131 = scmp.ne.s32.totalorder %s119, %s120
      %p132 = scmp.eq.s32.totalorder %s26, 1
      %p133 = por %p131, %p132
      %p135 = scmp.ne.s32.totalorder %s120, %s134
      %p136 = scmp.eq.s32.totalorder %s26, 0
      %p137 = por %p135, %p136
      %s139 = sadd.s32 %s138, 1
      %p142 = scmp.eq.s32.totalorder %s20, 1
      %p143 = scmp.ne.s32.totalorder %s138, %s140
      %p144 = scmp.eq.s32.totalorder %s20, 0
      %p145 = por %p143, %p144
      %p146 = scmp.ne.s32.totalorder %s138, %s140
      %p147 = scmp.eq.s32.totalorder %s25, 1
      %p148 = por %p146, %p147
      %p149 = scmp.ne.s32.totalorder %s140, %s141
      %p150 = scmp.eq.s32.totalorder %s25, 0
      %p151 = por %p149, %p150
      %p152 = scmp.ne.s32.totalorder %s140, %s141
      %p153 = scmp.eq.s32.totalorder %s26, 1
      %p154 = por %p152, %p153
      %p156 = scmp.ne.s32.totalorder %s141, %s155
      %p157 = scmp.eq.s32.totalorder %s26, 0
      %p158 = por %p156, %p157
      %s159 = ssub.s32 %s20, %s27
      %p160 = scmp.eq.s32.totalorder %s159, 0
      %s162 = sadd.s32 %s161, 1
      %s163 = scalar_select %p160, %s161, %s162
      %p166 = pneg %p160
      %p167 = scmp.eq.s32.totalorder %s20, 1
      %p168 = por %p166, %p167
      %p169 = scmp.ne.s32.totalorder %s161, %s164
      %p170 = scmp.eq.s32.totalorder %s20, 0
      %p171 = por %p169, %p170
      %p172 = scmp.ne.s32.totalorder %s161, %s164
      %p173 = scmp.eq.s32.totalorder %s25, 1
      %p174 = por %p172, %p173
      %p175 = scmp.ne.s32.totalorder %s164, %s165
      %p176 = scmp.eq.s32.totalorder %s25, 0
      %p177 = por %p175, %p176
      %p178 = scmp.ne.s32.totalorder %s164, %s165
      %p179 = scmp.eq.s32.totalorder %s26, 1
      %p180 = por %p178, %p179
      %p182 = scmp.ne.s32.totalorder %s165, %s181
      %p183 = scmp.eq.s32.totalorder %s26, 0
      %p184 = por %p182, %p183
      %p185 = scmp.le.s32.totalorder 1, %s20
      %p186 = scmp.lt.s32.totalorder %s20, 3
      %p187 = pnand %p185, %p186
      %p188 = pneg %p187
      // Predicated region
      $region9: #{tpu_custom_call.1} parent=5 // pred_check
        _
      $region10: #{tpu_custom_call.1} parent=5 // pred_check_branch
        %190 = sbr.rel (%p187) target = $region12
      $region11: #{tpu_custom_call.1} parent=5 // pred_region
        %s191 = ssub.s32 %s20, 1
        // Predicated region
        $region13: #{tpu_custom_call.1} parent=11 // pred_check
          %p192 = pneg %p67
        $region14: #{tpu_custom_call.1} parent=11 // pred_check_branch
          %194 = sbr.rel (%p192) target = $region16
        $region15: #{tpu_custom_call.1} parent=11 // pred_region
          %196 = vsyncadd [#allocation6], 0
          %s198 = sshll.u32 %s1, 4
          %s199 = int_to_ptr.hbm [resolvable:$true] %s198
          %s200 = sshll.u32 [#allocation5], 4
          %s201 = int_to_ptr.vmem [resolvable:$true] %s200
          %203 = dma.hbm_to_vmem [thread:$0]  %s199, 32, %s201, [#allocation6]
        $region16: #{tpu_custom_call.1} parent=11 // pred_fallthru
          _
        // Predicated region
        $region17: #{tpu_custom_call.1} parent=11 // pred_check
          %p204 = pneg %p88
        $region18: #{tpu_custom_call.1} parent=11 // pred_check_branch
          %206 = sbr.rel (%p204) target = $region20
        $region19: #{tpu_custom_call.1} parent=11 // pred_region
          %208 = vsyncadd [#allocation6], 0
          %s210 = sshll.u32 %s2, 4
          %s211 = int_to_ptr.hbm [resolvable:$true] %s210
          %s212 = sshll.u32 [#allocation7], 4
          %s213 = int_to_ptr.vmem [resolvable:$true] %s212
          %215 = dma.hbm_to_vmem [thread:$0]  %s211, 128, %s213, [#allocation6]
        $region20: #{tpu_custom_call.1} parent=11 // pred_fallthru
          _
        // Predicated region
        $region21: #{tpu_custom_call.1} parent=11 // pred_check
          %p216 = pneg %p109
        $region22: #{tpu_custom_call.1} parent=11 // pred_check_branch
          %218 = sbr.rel (%p216) target = $region24
        $region23: #{tpu_custom_call.1} parent=11 // pred_region
          _
        $region24: #{tpu_custom_call.1} parent=11 // pred_fallthru
          _
        // Predicated region
        $region25: #{tpu_custom_call.1} parent=11 // pred_check
          %p219 = pneg %p130
        $region26: #{tpu_custom_call.1} parent=11 // pred_check_branch
          %221 = sbr.rel (%p219) target = $region28
        $region27: #{tpu_custom_call.1} parent=11 // pred_region
          %223 = vsyncadd [#allocation9], 0
          %s224 = sshll.u32 %s4, 4
          %s225 = int_to_ptr.hbm [resolvable:$true] %s224
          %s226 = sshll.u32 [#allocation8], 4
          %s227 = int_to_ptr.vmem [resolvable:$true] %s226
          %232 = dma.hbm_to_vmem [thread:$0]  %s225, 512, %s227, [#allocation9], 128, 128, 8
        $region28: #{tpu_custom_call.1} parent=11 // pred_fallthru
          _
        // Predicated region
        $region29: #{tpu_custom_call.1} parent=11 // pred_check
          %p233 = pneg %p151
        $region30: #{tpu_custom_call.1} parent=11 // pred_check_branch
          %235 = sbr.rel (%p233) target = $region32
        $region31: #{tpu_custom_call.1} parent=11 // pred_region
          _
        $region32: #{tpu_custom_call.1} parent=11 // pred_fallthru
          _
      $region12: #{tpu_custom_call.1} parent=5 // pred_fallthru
        _
      %p236 = scmp.lt.s32.totalorder %s20, 2
      // Predicated region
      $region33: #{tpu_custom_call.1} parent=5 // pred_check
        %p237 = pneg %p236
      $region34: #{tpu_custom_call.1} parent=5 // pred_check_branch
        %239 = sbr.rel (%p237) target = $region36
      $region35: #{tpu_custom_call.1} parent=5 // pred_region
        // Predicated region
        $region37: #{tpu_custom_call.1} parent=35 // pred_check
          %p240 = pneg %p40
        $region38: #{tpu_custom_call.1} parent=35 // pred_check_branch
          %242 = sbr.rel (%p240) target = $region40
        $region39: #{tpu_custom_call.1} parent=35 // pred_region
          %s243 = sand.u32 %s30, 1
          %s244 = scalar_lea.sflag [#allocation3], %s243
          %s245 = sand.u32 %s30, 1
          %s246 = smul.addr %s245, 16
          %s247 = scalar_lea.vmem [#allocation2], %s246
          %249 = vsyncadd %s244, 0
          %s250 = smul.addr %s20, 2
          %s251 = smul.addr %s250, 8
          %s252 = scalar_lea.hbm %s0, %s251
          %s254 = sshll.u32 %s252, 4
          %s255 = int_to_ptr.hbm [resolvable:$true] %s254
          %s256 = sshll.u32 %s247, 4
          %s257 = int_to_ptr.vmem [resolvable:$true] %s256
          %259 = dma.hbm_to_vmem [thread:$0]  %s255, 256, %s257, %s244
        $region40: #{tpu_custom_call.1} parent=35 // pred_fallthru
          _
      $region36: #{tpu_custom_call.1} parent=5 // pred_fallthru
        _
      %p260 = scmp.le.s32.totalorder 1, %s20
      %p261 = scmp.lt.s32.totalorder %s20, 3
      %p262 = pnand %p260, %p261
      %p263 = pneg %p262
      // Predicated region
      $region41: #{tpu_custom_call.1} parent=5 // pred_check
        _
      $region42: #{tpu_custom_call.1} parent=5 // pred_check_branch
        %265 = sbr.rel (%p262) target = $region44
      $region43: #{tpu_custom_call.1} parent=5 // pred_region
        %s266 = ssub.s32 %s20, 1
        %s267 = sand.u32 %s33, 1
        %s268 = scalar_lea.sflag [#allocation3], %s267
        %s269 = sand.u32 %s33, 1
        %s270 = smul.addr %s269, 16
        %s271 = scalar_lea.vmem [#allocation2], %s270
        // Predicated region
        $region45: #{tpu_custom_call.1} parent=43 // pred_check
          %p272 = pneg %p46
        $region46: #{tpu_custom_call.1} parent=43 // pred_check_branch
          %274 = sbr.rel (%p272) target = $region48
        $region47: #{tpu_custom_call.1} parent=43 // pred_region
          %276 = dma.done %s268, 256
        $region48: #{tpu_custom_call.1} parent=43 // pred_fallthru
          _
        // Predicated region
        $region49: #{tpu_custom_call.1} parent=43 // pred_check
          %p277 = pneg %p67
        $region50: #{tpu_custom_call.1} parent=43 // pred_check_branch
          %279 = sbr.rel (%p277) target = $region52
        $region51: #{tpu_custom_call.1} parent=43 // pred_region
          %281 = dma.done [#allocation6], 32
        $region52: #{tpu_custom_call.1} parent=43 // pred_fallthru
          _
        // Predicated region
        $region53: #{tpu_custom_call.1} parent=43 // pred_check
          %p282 = pneg %p88
        $region54: #{tpu_custom_call.1} parent=43 // pred_check_branch
          %284 = sbr.rel (%p282) target = $region56
        $region55: #{tpu_custom_call.1} parent=43 // pred_region
          %286 = dma.done [#allocation6], 128
        $region56: #{tpu_custom_call.1} parent=43 // pred_fallthru
          _
        // Predicated region
        $region57: #{tpu_custom_call.1} parent=43 // pred_check
          %p287 = pneg %p130
        $region58: #{tpu_custom_call.1} parent=43 // pred_check_branch
          %289 = sbr.rel (%p287) target = $region60
        $region59: #{tpu_custom_call.1} parent=43 // pred_region
          %291 = dma.done [#allocation9], 512
        $region60: #{tpu_custom_call.1} parent=43 // pred_fallthru
          _
        %s292 = sand.u32 %s33, 1
        %s293 = scalar_lea.sflag [#allocation3], %s292
        %s294 = sand.u32 %s33, 1
        %s295 = smul.addr %s294, 16
        %s296 = scalar_lea.vmem [#allocation2], %s295
        %p297 = pneg %p46
        %p298 = pneg %p43
        %p299 = pneg %p67
        %p300 = pneg %p64
        %p301 = pneg %p88
        %p302 = pneg %p85
        %p303 = pneg %p109
        %p304 = pneg %p106
        %p305 = pneg %p130
        %p306 = pneg %p127
        %p307 = pneg %p151
        %p308 = pneg %p148
        %p309 = pneg %p177
        %p310 = pneg %p174
        %s311 = sand.u32 %s164, 1
        %s312 = scalar_lea.sflag [#allocation4], %s311
        %s313 = sand.u32 %s164, 1
        %s314 = smul.addr %s313, 2
        %s315 = scalar_lea.vmem [#allocation10], %s314
        %v316 = vld [vmem:[%s271] sm:$0xff]
        %v317 = vld [vmem:[%s271 + $0x8] sm:$0xff]
        %v318 = vadd.f32 %v316, %v317
        %319 = vadd.xlane.f32.xlu0 %v318
        %v320 = vpop.xlane.xlu0 %319
        %v321 = vld [vmem:[#allocation7] sm:$0xff]
        %v322 = vmul.f32 %v320, %v321
        %v323 = vld [vmem:[#allocation5] sm:$0x3]
        %v324 = vld [vmem:[%s3] sm:$0x1]
        %v326 = vperm.slane %v324, 0
        %vm328 = vcmask 64512
        %v330 = vsel %vm328, %v323, 0
        %332 = vmatpush.msra.mxu0 0.0
        %333 = vmatpush.msra.mxu0 0.0
        %334 = vmatpush.msra.mxu0 0.0
        %335 = vmatpush.msra.mxu0 0.0
        %336 = vmatpush.msra.mxu0 0.0
        %337 = vmatpush.msra.mxu0 0.0
        %338 = vmatpush.msra.mxu0 0.0
        %339 = vmatpush.msra.mxu0 0.0
        %340 = vmatpush.msra.mxu0 0.0
        %341 = vmatpush.msra.mxu0 0.0
        %342 = vmatpush.msra.mxu0 0.0
        %343 = vmatpush.msra.mxu0 0.0
        %344 = vmatpush.msra.mxu0 0.0
        %345 = vmatpush.msra.mxu0 0.0
        %346 = vmatpush.msra.mxu0 0.0
        %347 = vmatpush.msra.mxu0 %v322
        %348 = vmatmul.f32.gmra.mxu0 %v330
        %v349 = vpop.f32.mrf.mxu0
        %v350 = vadd.f32 %v326, %v349
        %351 = vdwg.mxu0
        %v352 = vld [vmem:[#allocation8] sm:$0xff]
        %v353 = vld [vmem:[#allocation8 + $0x8] sm:$0xff]
        %v354 = vld [vmem:[#allocation8 + $0x10] sm:$0xff]
        %v355 = vld [vmem:[#allocation8 + $0x18] sm:$0xff]
        %v356 = vld [vmem:[%s5] sm:$0x1]
        %v358 = vperm.slane %v356, 0
        %vm360 = vcmask 261120
        %v362 = vsel %vm360, %v350, 0
        %364 = vmatpush.msra.mxu0 0.0
        %365 = vmatpush.msra.mxu0 0.0
        %366 = vmatpush.msra.mxu0 0.0
        %367 = vmatpush.msra.mxu0 0.0
        %368 = vmatpush.msra.mxu0 0.0
        %369 = vmatpush.msra.mxu0 0.0
        %370 = vmatpush.msra.mxu0 0.0
        %371 = vmatpush.msra.mxu0 0.0
        %372 = vmatpush.msra.mxu0 0.0
        %373 = vmatpush.msra.mxu0 0.0
        %374 = vmatpush.msra.mxu0 0.0
        %375 = vmatpush.msra.mxu0 0.0
        %376 = vmatpush.msra.mxu0 %v355
        %377 = vmatpush.msra.mxu0 %v354
        %378 = vmatpush.msra.mxu0 %v353
        %379 = vmatpush.msra.mxu0 %v352
        %380 = vmatmul.f32.gmra.mxu0 %v362
        %v381 = vpop.f32.mrf.mxu0
        %v382 = vadd.f32 %v358, %v381
        %383 = vdwg.mxu0
        %384 = vst [vmem:[%s315] sm:$0x3] %v382
        %s385 = sand.u32 %s164, 1
        %s386 = scalar_lea.sflag [#allocation4], %s385
        %s387 = sand.u32 %s164, 1
        %s388 = smul.addr %s387, 2
        %s389 = scalar_lea.vmem [#allocation10], %s388
        // Predicated region
        $region61: #{tpu_custom_call.1} parent=43 // pred_check
          %p390 = pneg %p174
        $region62: #{tpu_custom_call.1} parent=43 // pred_check_branch
          %392 = sbr.rel (%p390) target = $region64
        $region63: #{tpu_custom_call.1} parent=43 // pred_region
          %394 = vsyncadd %s386, 0
          %s395 = smul.addr %s25, 2
          %s396 = scalar_lea.hbm %s6, %s395
          %s398 = sshll.u32 %s389, 4
          %s399 = int_to_ptr.vmem [resolvable:$true] %s398
          %s400 = sshll.u32 %s396, 4
          %s401 = int_to_ptr.hbm [resolvable:$true] %s400
          %403 = dma.vmem_to_hbm [thread:$0]  %s399, 32, %s401, %s386
        $region64: #{tpu_custom_call.1} parent=43 // pred_fallthru
          _
      $region44: #{tpu_custom_call.1} parent=5 // pred_fallthru
        _
      %p404 = scmp.le.s32.totalorder 2, %s20
      // Predicated region
      $region65: #{tpu_custom_call.1} parent=5 // pred_check
        %p405 = pneg %p404
      $region66: #{tpu_custom_call.1} parent=5 // pred_check_branch
        %407 = sbr.rel (%p405) target = $region68
      $region67: #{tpu_custom_call.1} parent=5 // pred_region
        %s408 = ssub.s32 %s20, 2
        // Predicated region
        $region69: #{tpu_custom_call.1} parent=67 // pred_check
          %p409 = pneg %p180
        $region70: #{tpu_custom_call.1} parent=67 // pred_check_branch
          %411 = sbr.rel (%p409) target = $region72
        $region71: #{tpu_custom_call.1} parent=67 // pred_region
          %s412 = sand.u32 %s165, 1
          %s413 = scalar_lea.sflag [#allocation4], %s412
          %s414 = sand.u32 %s165, 1
          %s415 = smul.addr %s414, 2
          %s416 = scalar_lea.vmem [#allocation10], %s415
          %418 = dma.done %s413, 32
        $region72: #{tpu_custom_call.1} parent=67 // pred_fallthru
          _
      $region68: #{tpu_custom_call.1} parent=5 // pred_fallthru
        _
    $region6: #{tpu_custom_call.1} parent=1 // loop_footer
      %s24 = sadd.s32 1, %s20
    $region7: #{tpu_custom_call.1} parent=1 // loop_footer_branch
      %19 = sbr.rel target = $region3
    $region8: #{tpu_custom_call.1} parent=1 // loop_exit
      _
    %419 = vsyncpa [#allocation3], 1
    %s420 = scalar_lea.sflag [#allocation3], 1
    %421 = vsyncpa %s420, 1
    %422 = vsyncpa [#allocation6], 1
    %423 = vsyncpa [#allocation9], 1
    %424 = vsyncpa [#allocation4], 1
    %s425 = scalar_lea.sflag [#allocation4], 1
    %426 = vsyncpa %s425, 1

</llo_original>
